<compile_context>
chip_gen: v7x
topology: tpu7x:2x2x1
jax: 0.10.0
libtpu: 0.0.40
codegen_flags: <defaults>
</compile_context>

<pallas_src>
import jax
import jax.numpy as jnp
from jax import lax
from jax.experimental import pallas as pl
from jax.experimental.pallas import tpu as pltpu

_EPS = 1e-6
_VMEM_LIMIT = 48 * 1024 * 1024  # safe on v5e/v6e (128 MiB) and v7x (64 MiB)


# --------------------------------------------------------------------------
# Small-N path: everything fused into one per-batch kernel.
# --------------------------------------------------------------------------
def _make_fused_kernel(n_nodes, head_channels, mxu_dtype, approx_recip):
    M = head_channels

    def kernel(x_ref, w_ref, o_ref):
        x = x_ref[0].astype(mxu_dtype)                         # (N, F)
        # Fused Q/K/V projection: one (N, F) @ (F, 3M) matmul.
        qkv = jnp.dot(x, w_ref[...], preferred_element_type=jnp.float32)
        q = qkv[:, :M]
        k = qkv[:, M:2 * M]
        v = qkv[:, 2 * M:]

        eps = jnp.float32(_EPS)
        q = jnp.where(q == 0.0, eps, q)                        # f32 fixup
        k = jnp.where(k == 0.0, eps, k)
        q = q * lax.rsqrt(jnp.sum(q * q, axis=-1, keepdims=True))
        k = k * lax.rsqrt(jnp.sum(k * k, axis=-1, keepdims=True))

        # kvs = K^T @ V without materializing the transpose.
        kvs = lax.dot_general(
            k.astype(mxu_dtype), v.astype(mxu_dtype),
            (((0,), (0,)), ((), ())),
            preferred_element_type=jnp.float32)                # (M, M)

        num = jnp.dot(q.astype(mxu_dtype), kvs.astype(mxu_dtype),
                      preferred_element_type=jnp.float32)
        num = num + jnp.float32(n_nodes) * v                   # (N, M)

        ks_sum = jnp.sum(k, axis=0, keepdims=True)             # (1, M)
        denom = jnp.sum(q * ks_sum, axis=-1, keepdims=True) + jnp.float32(n_nodes)

        inv = pl.reciprocal(denom, approx=approx_recip)        # EUP
        o_ref[0] = (num * inv).astype(o_ref.dtype)

    return kernel


def _sgformer_fused(x, w_qkv, head_channels, mxu_dtype, approx_recip):
    B, N, F = x.shape
    M = head_channels
    kernel = _make_fused_kernel(N, M, mxu_dtype, approx_recip)
    grid_spec = pltpu.PrefetchScalarGridSpec(
        num_scalar_prefetch=0,
        grid=(B,),
        in_specs=[
            pl.BlockSpec((1, N, F), lambda b: (b, 0, 0)),
            pl.BlockSpec((F, 3 * M), lambda b: (0, 0)),
        ],
        out_specs=pl.BlockSpec((1, N, M), lambda b: (b, 0, 0)),
    )
    return pl.pallas_call(
        kernel,
        out_shape=jax.ShapeDtypeStruct((B, N, M), x.dtype),
        grid_spec=grid_spec,
        compiler_params=pltpu.CompilerParams(
            dimension_semantics=("parallel",),
            vmem_limit_bytes=_VMEM_LIMIT),
    )(x, w_qkv)


# --------------------------------------------------------------------------
# Large-N path: two-pass N-tiled reduction + emit.
# --------------------------------------------------------------------------
def _make_kv_reduce_kernel(n_true, n_pad, block_n, head_channels, mxu_dtype):
    M = head_channels
    needs_mask = n_pad != n_true

    def kernel(x_ref, w_ref, kvs_ref, ksum_ref):
        nt = pl.program_id(1)

        @pl.when(nt == 0)
        def _():
            kvs_ref[...] = jnp.zeros_like(kvs_ref)
            ksum_ref[...] = jnp.zeros_like(ksum_ref)

        x = x_ref[0].astype(mxu_dtype)                         # (block_n, F)
        kv = jnp.dot(x, w_ref[...], preferred_element_type=jnp.float32)
        k = kv[:, :M]
        v = kv[:, M:]

        eps = jnp.float32(_EPS)
        k = jnp.where(k == 0.0, eps, k)
        k = k * lax.rsqrt(jnp.sum(k * k, axis=-1, keepdims=True))

        if needs_mask:
            # Exclude zero-padded rows (they would otherwise contribute the
            # eps-normalized vector to ks_sum / kvs).
            row = lax.broadcasted_iota(jnp.int32, (block_n, M), 0)
            valid = (nt * block_n + row) < n_true
            k = jnp.where(valid, k, 0.0)
            v = jnp.where(valid, v, 0.0)

        kvs_ref[0] += lax.dot_general(
            k.astype(mxu_dtype), v.astype(mxu_dtype),
            (((0,), (0,)), ((), ())),
            preferred_element_type=jnp.float32)                # (M, M)
        ksum_ref[0] += jnp.sum(k, axis=0, keepdims=True)       # (1, M)

    return kernel


def _make_emit_kernel(n_true, head_channels, mxu_dtype, approx_recip):
    M = head_channels

    def kernel(x_ref, w_ref, kvs_ref, ksum_ref, o_ref):
        x = x_ref[0].astype(mxu_dtype)                         # (block_n, F)
        qv = jnp.dot(x, w_ref[...], preferred_element_type=jnp.float32)
        q = qv[:, :M]
        v = qv[:, M:]

        eps = jnp.float32(_EPS)
        q = jnp.where(q == 0.0, eps, q)
        q = q * lax.rsqrt(jnp.sum(q * q, axis=-1, keepdims=True))

        kvs = kvs_ref[0]                                       # (M, M) f32
        ksum = ksum_ref[0]                                     # (1, M) f32

        num = jnp.dot(q.astype(mxu_dtype), kvs.astype(mxu_dtype),
                      preferred_element_type=jnp.float32)
        num = num + jnp.float32(n_true) * v
        denom = jnp.sum(q * ksum, axis=-1, keepdims=True) + jnp.float32(n_true)

        inv = pl.reciprocal(denom, approx=approx_recip)
        o_ref[0] = (num * inv).astype(o_ref.dtype)

    return kernel


def _sgformer_tiled(x, w_kv, w_qv, head_channels, block_n, mxu_dtype,
                    approx_recip):
    B, N, F = x.shape
    M = head_channels
    num_tiles = (N + block_n - 1) // block_n
    n_pad = num_tiles * block_n
    if n_pad != N:
        x = jnp.pad(x, ((0, 0), (0, n_pad - N), (0, 0)))

    # Pass 1: accumulate kvs and ks_sum over N tiles (reduction axis last).
    kv_kernel = _make_kv_reduce_kernel(N, n_pad, block_n, M, mxu_dtype)
    kvs, ksum = pl.pallas_call(
        kv_kernel,
        out_shape=(jax.ShapeDtypeStruct((B, M, M), jnp.float32),
                   jax.ShapeDtypeStruct((B, 1, M), jnp.float32)),
        grid_spec=pltpu.PrefetchScalarGridSpec(
            num_scalar_prefetch=0,
            grid=(B, num_tiles),
            in_specs=[
                pl.BlockSpec((1, block_n, F), lambda b, n: (b, n, 0)),
                pl.BlockSpec((F, 2 * M), lambda b, n: (0, 0)),
            ],
            out_specs=(
                pl.BlockSpec((1, M, M), lambda b, n: (b, 0, 0)),
                pl.BlockSpec((1, 1, M), lambda b, n: (b, 0, 0)),
            ),
        ),
        compiler_params=pltpu.CompilerParams(
            dimension_semantics=("parallel", "arbitrary"),
            vmem_limit_bytes=_VMEM_LIMIT),
    )(x, w_kv)

    # Pass 2: re-project Q/V per tile and emit output (fully parallel).
    emit_kernel = _make_emit_kernel(N, M, mxu_dtype, approx_recip)
    out = pl.pallas_call(
        emit_kernel,
        out_shape=jax.ShapeDtypeStruct((B, n_pad, M), x.dtype),
        grid_spec=pltpu.PrefetchScalarGridSpec(
            num_scalar_prefetch=0,
            grid=(B, num_tiles),
            in_specs=[
                pl.BlockSpec((1, block_n, F), lambda b, n: (b, n, 0)),
                pl.BlockSpec((F, 2 * M), lambda b, n: (0, 0)),
                pl.BlockSpec((1, M, M), lambda b, n: (b, 0, 0)),
                pl.BlockSpec((1, 1, M), lambda b, n: (b, 0, 0)),
            ],
            out_specs=pl.BlockSpec((1, block_n, M), lambda b, n: (b, n, 0)),
        ),
        compiler_params=pltpu.CompilerParams(
            dimension_semantics=("parallel", "parallel"),
            vmem_limit_bytes=_VMEM_LIMIT),
    )(x, w_qv, kvs, ksum)

    if n_pad != N:
        out = out[:, :N, :]
    return out


# --------------------------------------------------------------------------
# Public wrapper.
# --------------------------------------------------------------------------
def sgformer_attention(x, wq, wk, wv, mask=None, *, block_n=512,
                       mxu_dtype=jnp.float32, approx_recip=False):
    """SGFormer attention forward (heads=1, qkv_bias=False).

    x:  (B, N, F) float32.
    wq/wk/wv: (F, M) float32 (PyTorch Linear weights, transposed).
    mxu_dtype: jnp.float32 (exact) or jnp.bfloat16 (fast MXU path on
               v6e / v7x; accumulation stays f32).
    Returns (B, N, M) float32.
    """
    if mask is not None:
        # TODO(synk): optional `mask` (masked_fill of V + row-mask in pass 1)
        raise NotImplementedError("mask is not supported by this kernel yet")

    B, N, F = x.shape
    M = wq.shape[1]
    assert wk.shape == (F, M) and wv.shape == (F, M)

    block_n = max(8, (block_n // 8) * 8)
    if N <= block_n:
        w_qkv = jnp.concatenate([wq, wk, wv], axis=1).astype(mxu_dtype)
        return _sgformer_fused(x, w_qkv, M, mxu_dtype, approx_recip)

    w_kv = jnp.concatenate([wk, wv], axis=1).astype(mxu_dtype)
    w_qv = jnp.concatenate([wq, wv], axis=1).astype(mxu_dtype)
    return _sgformer_tiled(x, w_kv, w_qv, M, block_n, mxu_dtype, approx_recip)


def sgformer_attention_ref(x, wq, wk, wv):
    """Pure-JAX reference matching the PyTorch forward (heads=1, no mask)."""
    B, N, F = x.shape
    q = x @ wq
    k = x @ wk
    v = x @ wv
    eps = 1e-6
    q = jnp.where(q == 0.0, eps, q)
    k = jnp.where(k == 0.0, eps, k)
    q = q / jnp.linalg.norm(q, axis=-1, keepdims=True)
    k = k / jnp.linalg.norm(k, axis=-1, keepdims=True)
    kvs = jnp.einsum("blm,bld->bmd", k, v)
    num = jnp.einsum("bnm,bmd->bnd", q, kvs) + N * v
    ks_sum = jnp.sum(k, axis=1)                            # (B, M)
    denom = jnp.einsum("bnm,bm->bn", q, ks_sum)[..., None] + N
    return num / denom


if __name__ == "__main__":
    key = jax.random.PRNGKey(0)
    B, N, channels, head_channels = 2, 8, 32, 64

    kx, kq, kk, kv, kx2 = jax.random.split(key, 5)
    x = jax.random.normal(kx, (B, N, channels), dtype=jnp.float32)

    # torch.nn.Linear default init: U(-1/sqrt(fan_in), 1/sqrt(fan_in)), no bias.
    bound = 1.0 / (channels ** 0.5)
    wq = jax.random.uniform(kq, (channels, head_channels),
                            minval=-bound, maxval=bound, dtype=jnp.float32)
    wk = jax.random.uniform(kk, (channels, head_channels),
                            minval=-bound, maxval=bound, dtype=jnp.float32)
    wv = jax.random.uniform(kv, (channels, head_channels),
                            minval=-bound, maxval=bound, dtype=jnp.float32)

    # 1) Small-N fused path (f32, exact).
    out = jax.block_until_ready(sgformer_attention(x, wq, wk, wv))
    ref = sgformer_attention_ref(x, wq, wk, wv)
    assert out.shape == (B, N, head_channels)
    assert jnp.allclose(out, ref, atol=2e-5, rtol=2e-5), "fused path mismatch"

    # 2) Large-N two-pass tiled path (f32); non-divisible N exercises padding
    #    + row masking in the reduction pass.
    N2 = 300
    x2 = jax.random.normal(kx2, (B, N2, channels), dtype=jnp.float32)
    out2 = jax.block_until_ready(
        sgformer_attention(x2, wq, wk, wv, block_n=128))
    ref2 = sgformer_attention_ref(x2, wq, wk, wv)
    assert out2.shape == (B, N2, head_channels)
    assert jnp.allclose(out2, ref2, atol=1e-4, rtol=1e-4), "tiled path mismatch"

    # 3) bf16-MXU fast path (v6e/v7x): bf16 matmul inputs, f32 accumulation,
    #    approximate EUP reciprocal; loose tolerance by construction.
    out3 = jax.block_until_ready(
        sgformer_attention(x, wq, wk, wv, mxu_dtype=jnp.bfloat16,
                           approx_recip=True))
    assert jnp.allclose(out3, ref, atol=5e-2, rtol=5e-2), "bf16 path mismatch"

    print("KERNEL_OK")
</pallas_src>

<mosaic_0001>
module attributes {stable_mosaic.version = 11 : i64} {
  func.func @kernel(%arg0: i32, %arg1: memref<1x8x32xf32, #tpu.memory_space<vmem>>, %arg2: memref<32x192xf32, #tpu.memory_space<vmem>>, %arg3: memref<1x8x64xf32, #tpu.memory_space<vmem>>) attributes {dimension_semantics = [#tpu.dimension_semantics<parallel>], iteration_bounds = array<i64: 2>, scalar_prefetch = 0 : i64, scratch_operands = 0 : i64, tpu.core_type = #tpu.core_type<tc>, window_params = [{transform_indices = @transform_0, window_bounds = array<i64: 1, 8, 32>}, {pipeline_mode = #tpu.pipeline_mode<synchronous>, transform_indices = @transform_1, window_bounds = array<i64: 32, 192>}, {transform_indices = @transform_2, window_bounds = array<i64: 1, 8, 64>}]} {
    %c0 = arith.constant 0 : index
    %c0_0 = arith.constant 0 : index
    %c0_1 = arith.constant 0 : index
    %0 = vector.load %arg1[%c0, %c0_0, %c0_1] : memref<1x8x32xf32, #tpu.memory_space<vmem>>, vector<1x8x32xf32>
    %1 = vector.shape_cast %0 : vector<1x8x32xf32> to vector<8x32xf32>
    %c0_2 = arith.constant 0 : index
    %c0_3 = arith.constant 0 : index
    %2 = vector.load %arg2[%c0_2, %c0_3] : memref<32x192xf32, #tpu.memory_space<vmem>>, vector<32x192xf32>
    %cst = arith.constant dense<0.000000e+00> : vector<8x192xf32>
    %3 = tpu.matmul %1, %2, %cst {dimension_numbers = #tpu.dot_dimension_numbers<[1], [0], [0], [1], [0, 0, 1, 1], [], []>} : vector<8x32xf32>, vector<32x192xf32>, vector<8x192xf32> -> vector<8x192xf32>
    %4 = vector.extract_strided_slice %3 {offsets = [0, 0], sizes = [8, 64], strides = [1, 1]} : vector<8x192xf32> to vector<8x64xf32>
    %5 = vector.extract_strided_slice %3 {offsets = [0, 64], sizes = [8, 64], strides = [1, 1]} : vector<8x192xf32> to vector<8x64xf32>
    %6 = vector.extract_strided_slice %3 {offsets = [0, 128], sizes = [8, 64], strides = [1, 1]} : vector<8x192xf32> to vector<8x64xf32>
    %cst_4 = arith.constant 0.000000e+00 : f32
    %7 = vector.broadcast %cst_4 : f32 to vector<8x64xf32>
    %8 = arith.cmpf oeq, %4, %7 : vector<8x64xf32>
    %cst_5 = arith.constant 9.99999997E-7 : f32
    %9 = vector.broadcast %cst_5 : f32 to vector<8x64xf32>
    %10 = arith.select %8, %9, %4 : vector<8x64xi1>, vector<8x64xf32>
    %cst_6 = arith.constant 0.000000e+00 : f32
    %11 = vector.broadcast %cst_6 : f32 to vector<8x64xf32>
    %12 = arith.cmpf oeq, %5, %11 : vector<8x64xf32>
    %cst_7 = arith.constant 9.99999997E-7 : f32
    %13 = vector.broadcast %cst_7 : f32 to vector<8x64xf32>
    %14 = arith.select %12, %13, %5 : vector<8x64xi1>, vector<8x64xf32>
    %15 = arith.mulf %10, %10 : vector<8x64xf32>
    %cst_8 = arith.constant dense<0.000000e+00> : vector<8xf32>
    %16 = vector.multi_reduction <add>, %15, %cst_8 [1] : vector<8x64xf32> to vector<8xf32>
    %17 = vector.shape_cast %16 : vector<8xf32> to vector<8x1xf32>
    %18 = math.rsqrt %17 : vector<8x1xf32>
    %19 = vector.broadcast %18 : vector<8x1xf32> to vector<8x64xf32>
    %20 = arith.mulf %10, %19 : vector<8x64xf32>
    %21 = arith.mulf %14, %14 : vector<8x64xf32>
    %cst_9 = arith.constant dense<0.000000e+00> : vector<8xf32>
    %22 = vector.multi_reduction <add>, %21, %cst_9 [1] : vector<8x64xf32> to vector<8xf32>
    %23 = vector.shape_cast %22 : vector<8xf32> to vector<8x1xf32>
    %24 = math.rsqrt %23 : vector<8x1xf32>
    %25 = vector.broadcast %24 : vector<8x1xf32> to vector<8x64xf32>
    %26 = arith.mulf %14, %25 : vector<8x64xf32>
    %cst_10 = arith.constant dense<0.000000e+00> : vector<64x64xf32>
    %27 = tpu.matmul %26, %6, %cst_10 {dimension_numbers = #tpu.dot_dimension_numbers<[0], [0], [1], [1], [0, 1, 1, 1], [], []>} : vector<8x64xf32>, vector<8x64xf32>, vector<64x64xf32> -> vector<64x64xf32>
    %cst_11 = arith.constant dense<0.000000e+00> : vector<8x64xf32>
    %28 = tpu.matmul %20, %27, %cst_11 {dimension_numbers = #tpu.dot_dimension_numbers<[1], [0], [0], [1], [0, 0, 1, 1], [], []>} : vector<8x64xf32>, vector<64x64xf32>, vector<8x64xf32> -> vector<8x64xf32>
    %cst_12 = arith.constant 8.000000e+00 : f32
    %29 = vector.broadcast %cst_12 : f32 to vector<8x64xf32>
    %30 = arith.mulf %29, %6 : vector<8x64xf32>
    %31 = arith.addf %28, %30 : vector<8x64xf32>
    %cst_13 = arith.constant dense<0.000000e+00> : vector<64xf32>
    %32 = vector.multi_reduction <add>, %26, %cst_13 [0] : vector<8x64xf32> to vector<64xf32>
    %33 = vector.shape_cast %32 : vector<64xf32> to vector<1x64xf32>
    %34 = vector.broadcast %33 : vector<1x64xf32> to vector<8x64xf32>
    %35 = arith.mulf %20, %34 : vector<8x64xf32>
    %cst_14 = arith.constant dense<0.000000e+00> : vector<8xf32>
    %36 = vector.multi_reduction <add>, %35, %cst_14 [1] : vector<8x64xf32> to vector<8xf32>
    %37 = vector.shape_cast %36 : vector<8xf32> to vector<8x1xf32>
    %cst_15 = arith.constant 8.000000e+00 : f32
    %38 = vector.broadcast %cst_15 : f32 to vector<8x1xf32>
    %39 = arith.addf %37, %38 : vector<8x1xf32>
    %40 = tpu.reciprocal %39 : vector<8x1xf32> -> vector<8x1xf32>
    %41 = vector.broadcast %40 : vector<8x1xf32> to vector<8x64xf32>
    %42 = arith.mulf %31, %41 : vector<8x64xf32>
    %c0_16 = arith.constant 0 : index
    %c0_17 = arith.constant 0 : index
    %c0_18 = arith.constant 0 : index
    %43 = vector.load %arg3[%c0_16, %c0_17, %c0_18] : memref<1x8x64xf32, #tpu.memory_space<vmem>>, vector<1x8x64xf32>
    %44 = vector.shape_cast %43 : vector<1x8x64xf32> to vector<8x64xf32>
    %45 = vector.shape_cast %42 : vector<8x64xf32> to vector<1x8x64xf32>
    tpu.vector_store %arg3[%c0_16, %c0_17, %c0_18], %45 {strides = array<i32>} : memref<1x8x64xf32, #tpu.memory_space<vmem>>, vector<1x8x64xf32>,
    return
  }
  func.func @transform_0(%arg0: i32) -> (i32, i32, i32) {
    %c0_i32 = arith.constant 0 : i32
    %c0_i32_0 = arith.constant 0 : i32
    %c0_i32_1 = arith.constant 0 : i32
    return %arg0, %c0_i32, %c0_i32_0 : i32, i32, i32
  }
  func.func @transform_1(%arg0: i32) -> (i32, i32) {
    %c0_i32 = arith.constant 0 : i32
    %c0_i32_0 = arith.constant 0 : i32
    %c0_i32_1 = arith.constant 0 : i32
    return %c0_i32, %c0_i32_0 : i32, i32
  }
  func.func @transform_2(%arg0: i32) -> (i32, i32, i32) {
    %c0_i32 = arith.constant 0 : i32
    %c0_i32_0 = arith.constant 0 : i32
    %c0_i32_1 = arith.constant 0 : i32
    return %arg0, %c0_i32, %c0_i32_0 : i32, i32, i32
  }
}

</mosaic_0001>

<llo_original>
// kernel: tpu_custom_call.1
$region0: #{tpu_custom_call.1}
  #allocation0 [shape = 'u32[]', space=smem, size = 0x4, offset = 0x4, fixed_abs, tag = 'smem constant byte address 0x4 - core index']
  #allocation1 [shape = 'u32[144,128]{1,0:T(1,128)}', space=vmem, size = 0x12000, scoped, tag = 'internal scratch']
  %s0 = inlined_call_operand.hbm [shape: f32[2,8,32], index: 0, kind: input, shape index: {}]
  %s1 = inlined_call_operand.hbm [shape: f32[32,192], index: 1, kind: input, shape index: {}]
  %s2 = inlined_call_operand.hbm [shape: f32[2,8,64], index: 2, kind: output, shape index: {}]
  %s3 = sld [smem:[#allocation0]]
  $region49: #{tpu_custom_call.1} parent=0
    _
  %s5 = ssub.s32 1, %s3
  %s6 = scalar_select 0, %s5, %s3
  $region1: #{tpu_custom_call.1} parent=0
    #allocation2 [shape = 'u8[8192]{0}', space=vmem, size = 0x2000, scoped, tag = 'input window, operand 0']
    #allocation3 [shape = 's32[2]{0}', space=sflag, size = 0x8, scoped, tag = 'scoped memory for tpu_custom_call.1']
    #allocation4 [shape = 's32[2]{0}', space=sflag, size = 0x8, scoped, tag = 'scoped memory for tpu_custom_call.1']
    #allocation5 [shape = 'u8[32768]{0}', space=vmem, size = 0x8000, scoped, tag = 'input window, operand 1, single buffered']
    #allocation6 [shape = 's32[1]{0}', space=sflag, size = 0x4, scoped, tag = 'scoped memory for tpu_custom_call.1']
    #allocation7 [shape = 'u8[8192]{0}', space=vmem, size = 0x2000, scoped, tag = 'output window, operand 0']
    %7 = vsyncpa [#allocation3], 0
    %s8 = scalar_lea.sflag [#allocation3], 1
    %9 = vsyncpa %s8, 0
    %10 = vsyncpa [#allocation6], 0
    %11 = vsyncpa [#allocation4], 0
    %s12 = scalar_lea.sflag [#allocation4], 1
    %13 = vsyncpa %s12, 0
    loop: start=0, step=1, limit=4
    $region2: #{tpu_custom_call.1} parent=1 // loop_pre_header
      _
    $region3: #{tpu_custom_call.1} parent=1 // loop_header
      %s15 = sphi 0, %s19
      %p16 = scmp.ge.s32.totalorder %s15, 4
      %s25 = sphi 0, %s27
      %s28 = sphi 0, %s25
      %s29 = sphi 0, %s28
      %s45 = sphi 0, %s29
      %s49 = sphi 0, %s49
      %s51 = sphi 0, %s49
      %s52 = sphi 0, %s51
      %s66 = sphi 0, %s52
      %s72 = sphi 0, %s74
      %s75 = sphi 0, %s72
      %s76 = sphi 0, %s75
      %s92 = sphi 0, %s76
    $region4: #{tpu_custom_call.1} parent=1 // loop_header_branch
      %18 = sbr.rel (%p16) target = $region8
    $region5: #{tpu_custom_call.1} parent=1 // loop_body
      %s20 = ssub.s32 %s15, 1
      %s21 = ssub.s32 %s15, 2
      %s22 = sadd.s32 %s15, 1
      %s23 = ssub.s32 %s15, %s22
      %p24 = scmp.eq.s32.totalorder %s23, 0
      %s26 = sadd.s32 %s25, 1
      %s27 = scalar_select %p24, %s25, %s26
      %p30 = pneg %p24
      %p31 = scmp.eq.s32.totalorder %s15, 1
      %p32 = por %p30, %p31
      %p33 = scmp.ne.s32.totalorder %s25, %s28
      %p34 = scmp.eq.s32.totalorder %s15, 0
      %p35 = por %p33, %p34
      %p36 = scmp.ne.s32.totalorder %s25, %s28
      %p37 = scmp.eq.s32.totalorder %s20, 1
      %p38 = por %p36, %p37
      %p39 = scmp.ne.s32.totalorder %s28, %s29
      %p40 = scmp.eq.s32.totalorder %s20, 0
      %p41 = por %p39, %p40
      %p42 = scmp.ne.s32.totalorder %s28, %s29
      %p43 = scmp.eq.s32.totalorder %s21, 1
      %p44 = por %p42, %p43
      %p46 = scmp.ne.s32.totalorder %s29, %s45
      %p47 = scmp.eq.s32.totalorder %s21, 0
      %p48 = por %p46, %p47
      %s50 = sadd.s32 %s49, 1
      %p53 = scmp.eq.s32.totalorder %s15, 1
      %p54 = scmp.ne.s32.totalorder %s49, %s51
      %p55 = scmp.eq.s32.totalorder %s15, 0
      %p56 = por %p54, %p55
      %p57 = scmp.ne.s32.totalorder %s49, %s51
      %p58 = scmp.eq.s32.totalorder %s20, 1
      %p59 = por %p57, %p58
      %p60 = scmp.ne.s32.totalorder %s51, %s52
      %p61 = scmp.eq.s32.totalorder %s20, 0
      %p62 = por %p60, %p61
      %p63 = scmp.ne.s32.totalorder %s51, %s52
      %p64 = scmp.eq.s32.totalorder %s21, 1
      %p65 = por %p63, %p64
      %p67 = scmp.ne.s32.totalorder %s52, %s66
      %p68 = scmp.eq.s32.totalorder %s21, 0
      %p69 = por %p67, %p68
      %s70 = ssub.s32 %s15, %s22
      %p71 = scmp.eq.s32.totalorder %s70, 0
      %s73 = sadd.s32 %s72, 1
      %s74 = scalar_select %p71, %s72, %s73
      %p77 = pneg %p71
      %p78 = scmp.eq.s32.totalorder %s15, 1
      %p79 = por %p77, %p78
      %p80 = scmp.ne.s32.totalorder %s72, %s75
      %p81 = scmp.eq.s32.totalorder %s15, 0
      %p82 = por %p80, %p81
      %p83 = scmp.ne.s32.totalorder %s72, %s75
      %p84 = scmp.eq.s32.totalorder %s20, 1
      %p85 = por %p83, %p84
      %p86 = scmp.ne.s32.totalorder %s75, %s76
      %p87 = scmp.eq.s32.totalorder %s20, 0
      %p88 = por %p86, %p87
      %p89 = scmp.ne.s32.totalorder %s75, %s76
      %p90 = scmp.eq.s32.totalorder %s21, 1
      %p91 = por %p89, %p90
      %p93 = scmp.ne.s32.totalorder %s76, %s92
      %p94 = scmp.eq.s32.totalorder %s21, 0
      %p95 = por %p93, %p94
      %p96 = scmp.le.s32.totalorder 1, %s15
      %p97 = scmp.lt.s32.totalorder %s15, 3
      %p98 = pnand %p96, %p97
      %p99 = pneg %p98
      // Predicated region
      $region9: #{tpu_custom_call.1} parent=5 // pred_check
        _
      $region10: #{tpu_custom_call.1} parent=5 // pred_check_branch
        %101 = sbr.rel (%p98) target = $region12
      $region11: #{tpu_custom_call.1} parent=5 // pred_region
        %s102 = ssub.s32 %s15, 1
        // Predicated region
        $region13: #{tpu_custom_call.1} parent=11 // pred_check
          %p103 = pneg %p62
        $region14: #{tpu_custom_call.1} parent=11 // pred_check_branch
          %105 = sbr.rel (%p103) target = $region16
        $region15: #{tpu_custom_call.1} parent=11 // pred_region
          %s107 = ssub.s32 1024, 1024
          %108 = vsyncadd [#allocation6], %s107
          %s109 = sshll.u32 [#allocation5], 4
          %s110 = int_to_ptr.vmem [resolvable:$true] %s109
          %115 = dma.hbm_to_vmem [thread:$0]  %s1, 1024, %s110, [#allocation6], 256, 256, 16
        $region16: #{tpu_custom_call.1} parent=11 // pred_fallthru
          _
      $region12: #{tpu_custom_call.1} parent=5 // pred_fallthru
        _
      %p116 = scmp.lt.s32.totalorder %s15, 2
      // Predicated region
      $region17: #{tpu_custom_call.1} parent=5 // pred_check
        %p117 = pneg %p116
      $region18: #{tpu_custom_call.1} parent=5 // pred_check_branch
        %119 = sbr.rel (%p117) target = $region20
      $region19: #{tpu_custom_call.1} parent=5 // pred_region
        // Predicated region
        $region21: #{tpu_custom_call.1} parent=19 // pred_check
          %p120 = pneg %p35
        $region22: #{tpu_custom_call.1} parent=19 // pred_check_branch
          %122 = sbr.rel (%p120) target = $region24
        $region23: #{tpu_custom_call.1} parent=19 // pred_region
          %s123 = sand.u32 %s25, 1
          %s124 = scalar_lea.sflag [#allocation3], %s123
          %s125 = sand.u32 %s25, 1
          %s126 = smul.addr %s125, 8
          %s127 = scalar_lea.vmem [#allocation2], %s126
          %s129 = ssub.s32 128, 128
          %130 = vsyncadd %s124, %s129
          %s131 = smul.addr %s15, 128
          %s132 = scalar_lea.hbm %s0, %s131
          %s134 = sshll.u32 %s127, 4
          %s135 = int_to_ptr.vmem [resolvable:$true] %s134
          %137 = dma.hbm_to_vmem [thread:$0]  %s132, 128, %s135, %s124
        $region24: #{tpu_custom_call.1} parent=19 // pred_fallthru
          _
      $region20: #{tpu_custom_call.1} parent=5 // pred_fallthru
        _
      %p138 = scmp.le.s32.totalorder 1, %s15
      %p139 = scmp.lt.s32.totalorder %s15, 3
      %p140 = pnand %p138, %p139
      %p141 = pneg %p140
      // Predicated region
      $region25: #{tpu_custom_call.1} parent=5 // pred_check
        _
      $region26: #{tpu_custom_call.1} parent=5 // pred_check_branch
        %143 = sbr.rel (%p140) target = $region28
      $region27: #{tpu_custom_call.1} parent=5 // pred_region
        %s144 = ssub.s32 %s15, 1
        %s145 = sand.u32 %s28, 1
        %s146 = scalar_lea.sflag [#allocation3], %s145
        %s147 = sand.u32 %s28, 1
        %s148 = smul.addr %s147, 8
        %s149 = scalar_lea.vmem [#allocation2], %s148
        // Predicated region
        $region29: #{tpu_custom_call.1} parent=27 // pred_check
          %p150 = pneg %p41
        $region30: #{tpu_custom_call.1} parent=27 // pred_check_branch
          %152 = sbr.rel (%p150) target = $region32
        $region31: #{tpu_custom_call.1} parent=27 // pred_region
          %153 = dma.done %s146, 128
        $region32: #{tpu_custom_call.1} parent=27 // pred_fallthru
          _
        // Predicated region
        $region33: #{tpu_custom_call.1} parent=27 // pred_check
          %p154 = pneg %p62
        $region34: #{tpu_custom_call.1} parent=27 // pred_check_branch
          %156 = sbr.rel (%p154) target = $region36
        $region35: #{tpu_custom_call.1} parent=27 // pred_region
          %157 = dma.done [#allocation6], 1024
        $region36: #{tpu_custom_call.1} parent=27 // pred_fallthru
          _
        %s158 = sand.u32 %s28, 1
        %s159 = scalar_lea.sflag [#allocation3], %s158
        %s160 = sand.u32 %s28, 1
        %s161 = smul.addr %s160, 8
        %s162 = scalar_lea.vmem [#allocation2], %s161
        %p163 = pneg %p41
        %p164 = pneg %p38
        %p165 = pneg %p62
        %p166 = pneg %p59
        %p167 = pneg %p88
        %p168 = pneg %p85
        %s169 = sand.u32 %s75, 1
        %s170 = scalar_lea.sflag [#allocation4], %s169
        %s171 = sand.u32 %s75, 1
        %s172 = smul.addr %s171, 8
        %s173 = scalar_lea.vmem [#allocation7], %s172
        %v174 = vld [vmem:[%s149] sm:$0xff]
        %v175 = vld [vmem:[#allocation5] sm:$0xff]
        %v176 = vld [vmem:[#allocation5 + $0x8] sm:$0xff]
        %v177 = vld [vmem:[#allocation5 + $0x10] sm:$0xff]
        %v178 = vld [vmem:[#allocation5 + $0x18] sm:$0xff]
        %v179 = vld [vmem:[#allocation5 + $0x20] sm:$0xff]
        %v180 = vld [vmem:[#allocation5 + $0x28] sm:$0xff]
        %v181 = vld [vmem:[#allocation5 + $0x30] sm:$0xff]
        %v182 = vld [vmem:[#allocation5 + $0x38] sm:$0xff]
        %vm183 = vcmask 261120
        %v185 = vsel %vm183, %v174, 0
        %187 = vmatprep.subr.mxu0 %v176
        %188 = vmatpush1.msra.mxu0 %v175
        %189 = vmatprep.subr.mxu0 %v178
        %190 = vmatpush1.msra.mxu0 %v177
        %191 = vmatprep.subr.mxu0 %v180
        %192 = vmatpush1.msra.mxu0 %v179
        %193 = vmatprep.subr.mxu0 %v182
        %194 = vmatpush1.msra.mxu0 %v181
        %195 = vmatprep.subr.mxu0 0.0
        %196 = vmatpush1.msra.mxu0 0.0
        %197 = vmatprep.subr.mxu0 0.0
        %198 = vmatpush1.msra.mxu0 0.0
        %199 = vmatprep.subr.mxu0 0.0
        %200 = vmatpush1.msra.mxu0 0.0
        %201 = vmatprep.subr.mxu0 0.0
        %202 = vmatpush1.msra.mxu0 0.0
        %203 = vmatprep.subr.mxu0 0.0
        %204 = vmatpush1.msra.mxu0 0.0
        %205 = vmatprep.subr.mxu0 0.0
        %206 = vmatpush1.msra.mxu0 0.0
        %207 = vmatprep.subr.mxu0 0.0
        %208 = vmatpush1.msra.mxu0 0.0
        %209 = vmatprep.subr.mxu0 0.0
        %210 = vmatpush1.msra.mxu0 0.0
        %211 = vmatprep.subr.mxu0 0.0
        %212 = vmatpush1.msra.mxu0 0.0
        %213 = vmatprep.subr.mxu0 0.0
        %214 = vmatpush1.msra.mxu0 0.0
        %215 = vmatprep.subr.mxu0 0.0
        %216 = vmatpush1.msra.mxu0 0.0
        %217 = vmatprep.subr.mxu0 0.0
        %218 = vmatpush1.msra.mxu0 0.0
        %219 = vmatprep.subr.mxu0 0.0
        %220 = vmatpush1.msra.mxu0 0.0
        %221 = vmatprep.subr.mxu0 0.0
        %222 = vmatpush1.msra.mxu0 0.0
        %223 = vmatprep.subr.mxu0 0.0
        %224 = vmatpush1.msra.mxu0 0.0
        %225 = vmatprep.subr.mxu0 0.0
        %226 = vmatpush1.msra.mxu0 0.0
        %227 = vmatprep.subr.mxu0 0.0
        %228 = vmatpush1.msra.mxu0 0.0
        %229 = vmatprep.subr.mxu0 0.0
        %230 = vmatpush1.msra.mxu0 0.0
        %231 = vmatprep.subr.mxu0 0.0
        %232 = vmatpush1.msra.mxu0 0.0
        %233 = vmatprep.subr.mxu0 0.0
        %234 = vmatpush1.msra.mxu0 0.0
        %235 = vmatprep.subr.mxu0 0.0
        %236 = vmatpush1.msra.mxu0 0.0
        %237 = vmatprep.subr.mxu0 0.0
        %238 = vmatpush1.msra.mxu0 0.0
        %239 = vmatprep.subr.mxu0 0.0
        %240 = vmatpush1.msra.mxu0 0.0
        %241 = vmatprep.subr.mxu0 0.0
        %242 = vmatpush1.msra.mxu0 0.0
        %243 = vmatprep.subr.mxu0 0.0
        %244 = vmatpush1.msra.mxu0 0.0
        %245 = vmatprep.subr.mxu0 0.0
        %246 = vmatpush1.msra.mxu0 0.0
        %247 = vmatprep.subr.mxu0 0.0
        %248 = vmatpush1.msra.mxu0 0.0
        %249 = vmatprep.subr.mxu0 0.0
        %250 = vmatpush1.msra.mxu0 0.0
        %251 = vmatprep.mubr.f32.mxu0 0.0
        %252 = vmatmul.mubr.f32.gmra.mrb[0].mxu0 %v185
        %v253 = vpop.f32.mrb[0].mxu0
        %v254 = vadd.f32 0.0, %v253
        %v255 = vpop.f32.mrb[0].mxu0
        %v256 = vadd.f32 0.0, %v255
        %257 = vdwg.mxu0
        %vm258 = vcmp.eq.f32.partialorder %v254, 0.0
        %v259 = vsel %vm258, 1e-06, %v254
        %v260 = vmul.f32 %v259, %v259
        %vm261 = vcmask 523264
        %v262 = vsel %vm261, %v260, 0.0
        %263 = vadd.xlane.f32.xlu0 %v262
        %v264 = vpop.xlane.xlu0 %263
        %v265 = vrsqrt.pop %v264
        %v266 = vmul.f32 %v259, %v265
        %268 = vrot.lane.b32.xlu0 %v260, 64
        %v269 = vpop.permute.xlu0 %268
        %v271 = vsel %vm261, %v269, 0.0
        %272 = vadd.xlane.f32.xlu0 %v271
        %v273 = vpop.xlane.xlu0 %272
        %v274 = vrsqrt.pop %v273
        %v275 = vmul.f32 %v259, %v274
        %277 = vrot.lane.b32.xlu0 %v275, 64
        %v278 = vpop.permute.xlu0 %277
        %280 = vxpose.xlu0.b32.start [1/16] %v278, 128
        %281 = vxpose.xlu0.b32.cont [2/16] 0.0, 128
        %282 = vxpose.xlu0.b32.cont [3/16] 0.0, 128
        %283 = vxpose.xlu0.b32.cont [4/16] 0.0, 128
        %284 = vxpose.xlu0.b32.cont [5/16] 0.0, 128
        %285 = vxpose.xlu0.b32.cont [6/16] 0.0, 128
        %286 = vxpose.xlu0.b32.cont [7/16] 0.0, 128
        %287 = vxpose.xlu0.b32.cont [8/16] 0.0, 128
        %288 = vxpose.xlu0.b32.cont [9/16] 0.0, 128
        %289 = vxpose.xlu0.b32.cont [10/16] 0.0, 128
        %290 = vxpose.xlu0.b32.cont [11/16] 0.0, 128
        %291 = vxpose.xlu0.b32.cont [12/16] 0.0, 128
        %292 = vxpose.xlu0.b32.cont [13/16] 0.0, 128
        %293 = vxpose.xlu0.b32.cont [14/16] 0.0, 128
        %294 = vxpose.xlu0.b32.cont [15/16] 0.0, 128
        %295 = vxpose.xlu0.b32.end [16/16] 0.0, 128
        %v296 = vpop.trf.xlu0
        %v297 = vpop.trf.xlu0
        %v298 = vpop.trf.xlu0
        %v299 = vpop.trf.xlu0
        %v300 = vpop.trf.xlu0
        %v301 = vpop.trf.xlu0
        %v302 = vpop.trf.xlu0
        %v303 = vpop.trf.xlu0
        %v304 = vpop.trf.xlu0
        %v305 = vpop.trf.xlu0
        %v306 = vpop.trf.xlu0
        %v307 = vpop.trf.xlu0
        %v308 = vpop.trf.xlu0
        %v309 = vpop.trf.xlu0
        %v310 = vpop.trf.xlu0
        %v311 = vpop.trf.xlu0
        %vm312 = vcmask 64512
        %v314 = vsel %vm312, %v296, 0
        %v317 = vsel %vm312, %v297, 0
        %v320 = vsel %vm312, %v298, 0
        %v323 = vsel %vm312, %v299, 0
        %v326 = vsel %vm312, %v300, 0
        %v329 = vsel %vm312, %v301, 0
        %v332 = vsel %vm312, %v302, 0
        %v335 = vsel %vm312, %v303, 0
        %337 = vmatprep.subr.mxu0 0.0
        %338 = vmatpush1.msra.mxu0 %v256
        %339 = vmatprep.subr.mxu0 0.0
        %340 = vmatpush1.msra.mxu0 0.0
        %341 = vmatprep.subr.mxu0 0.0
        %342 = vmatpush1.msra.mxu0 0.0
        %343 = vmatprep.subr.mxu0 0.0
        %344 = vmatpush1.msra.mxu0 0.0
        %345 = vmatprep.subr.mxu0 0.0
        %346 = vmatpush1.msra.mxu0 0.0
        %347 = vmatprep.subr.mxu0 0.0
        %348 = vmatpush1.msra.mxu0 0.0
        %349 = vmatprep.subr.mxu0 0.0
        %350 = vmatpush1.msra.mxu0 0.0
        %351 = vmatprep.subr.mxu0 0.0
        %352 = vmatpush1.msra.mxu0 0.0
        %353 = vmatprep.subr.mxu0 0.0
        %354 = vmatpush1.msra.mxu0 0.0
        %355 = vmatprep.subr.mxu0 0.0
        %356 = vmatpush1.msra.mxu0 0.0
        %357 = vmatprep.subr.mxu0 0.0
        %358 = vmatpush1.msra.mxu0 0.0
        %359 = vmatprep.subr.mxu0 0.0
        %360 = vmatpush1.msra.mxu0 0.0
        %361 = vmatprep.subr.mxu0 0.0
        %362 = vmatpush1.msra.mxu0 0.0
        %363 = vmatprep.subr.mxu0 0.0
        %364 = vmatpush1.msra.mxu0 0.0
        %365 = vmatprep.subr.mxu0 0.0
        %366 = vmatpush1.msra.mxu0 0.0
        %367 = vmatprep.subr.mxu0 0.0
        %368 = vmatpush1.msra.mxu0 0.0
        %369 = vmatprep.subr.mxu0 0.0
        %370 = vmatpush1.msra.mxu0 0.0
        %371 = vmatprep.subr.mxu0 0.0
        %372 = vmatpush1.msra.mxu0 0.0
        %373 = vmatprep.subr.mxu0 0.0
        %374 = vmatpush1.msra.mxu0 0.0
        %375 = vmatprep.subr.mxu0 0.0
        %376 = vmatpush1.msra.mxu0 0.0
        %377 = vmatprep.subr.mxu0 0.0
        %378 = vmatpush1.msra.mxu0 0.0
        %379 = vmatprep.subr.mxu0 0.0
        %380 = vmatpush1.msra.mxu0 0.0
        %381 = vmatprep.subr.mxu0 0.0
        %382 = vmatpush1.msra.mxu0 0.0
        %383 = vmatprep.subr.mxu0 0.0
        %384 = vmatpush1.msra.mxu0 0.0
        %385 = vmatprep.subr.mxu0 0.0
        %386 = vmatpush1.msra.mxu0 0.0
        %387 = vmatprep.subr.mxu0 0.0
        %388 = vmatpush1.msra.mxu0 0.0
        %389 = vmatprep.subr.mxu0 0.0
        %390 = vmatpush1.msra.mxu0 0.0
        %391 = vmatprep.subr.mxu0 0.0
        %392 = vmatpush1.msra.mxu0 0.0
        %393 = vmatprep.subr.mxu0 0.0
        %394 = vmatpush1.msra.mxu0 0.0
        %395 = vmatprep.subr.mxu0 0.0
        %396 = vmatpush1.msra.mxu0 0.0
        %397 = vmatprep.subr.mxu0 0.0
        %398 = vmatpush1.msra.mxu0 0.0
        %399 = vmatprep.subr.mxu0 0.0
        %400 = vmatpush1.msra.mxu0 0.0
        %401 = vmatprep.mubr.f32.mxu0 0.0
        %402 = vmatmul.mubr.f32.gmra.mrb[0].mxu0 %v314
        %v403 = vpop.f32.mrb[0].mxu0
        %v404 = vadd.f32 0.0, %v403
        %v405 = vpop.f32.mrb[0].mxu0
        %406 = vmatprep.mubr.f32.mxu0 0.0
        %407 = vmatmul.mubr.f32.gmra.mrb[0].mxu0 %v317
        %v408 = vpop.f32.mrb[0].mxu0
        %v409 = vadd.f32 0.0, %v408
        %v410 = vpop.f32.mrb[0].mxu0
        %411 = vmatprep.mubr.f32.mxu0 0.0
        %412 = vmatmul.mubr.f32.gmra.mrb[0].mxu0 %v320
        %v413 = vpop.f32.mrb[0].mxu0
        %v414 = vadd.f32 0.0, %v413
        %v415 = vpop.f32.mrb[0].mxu0
        %416 = vmatprep.mubr.f32.mxu0 0.0
        %417 = vmatmul.mubr.f32.gmra.mrb[0].mxu0 %v323
        %v418 = vpop.f32.mrb[0].mxu0
        %v419 = vadd.f32 0.0, %v418
        %v420 = vpop.f32.mrb[0].mxu0
        %421 = vmatprep.mubr.f32.mxu0 0.0
        %422 = vmatmul.mubr.f32.gmra.mrb[0].mxu0 %v326
        %v423 = vpop.f32.mrb[0].mxu0
        %v424 = vadd.f32 0.0, %v423
        %v425 = vpop.f32.mrb[0].mxu0
        %426 = vmatprep.mubr.f32.mxu0 0.0
        %427 = vmatmul.mubr.f32.gmra.mrb[0].mxu0 %v329
        %v428 = vpop.f32.mrb[0].mxu0
        %v429 = vadd.f32 0.0, %v428
        %v430 = vpop.f32.mrb[0].mxu0
        %431 = vmatprep.mubr.f32.mxu0 0.0
        %432 = vmatmul.mubr.f32.gmra.mrb[0].mxu0 %v332
        %v433 = vpop.f32.mrb[0].mxu0
        %v434 = vadd.f32 0.0, %v433
        %v435 = vpop.f32.mrb[0].mxu0
        %436 = vmatprep.mubr.f32.mxu0 0.0
        %437 = vmatmul.mubr.f32.gmra.mrb[0].mxu0 %v335
        %v438 = vpop.f32.mrb[0].mxu0
        %v439 = vadd.f32 0.0, %v438
        %v440 = vpop.f32.mrb[0].mxu0
        %441 = vdwg.mxu0
        %v442 = vmul.f32 %v256, 8.0
        %v444 = vsel %vm261, %v266, 0
        %446 = vmatprep.subr.mxu0 0.0
        %447 = vmatpush1.msra.mxu0 %v404
        %448 = vmatprep.subr.mxu0 0.0
        %449 = vmatpush1.msra.mxu0 %v409
        %450 = vmatprep.subr.mxu0 0.0
        %451 = vmatpush1.msra.mxu0 %v414
        %452 = vmatprep.subr.mxu0 0.0
        %453 = vmatpush1.msra.mxu0 %v419
        %454 = vmatprep.subr.mxu0 0.0
        %455 = vmatpush1.msra.mxu0 %v424
        %456 = vmatprep.subr.mxu0 0.0
        %457 = vmatpush1.msra.mxu0 %v429
        %458 = vmatprep.subr.mxu0 0.0
        %459 = vmatpush1.msra.mxu0 %v434
        %460 = vmatprep.subr.mxu0 0.0
        %461 = vmatpush1.msra.mxu0 %v439
        %462 = vmatprep.subr.mxu0 0.0
        %463 = vmatpush1.msra.mxu0 0.0
        %464 = vmatprep.subr.mxu0 0.0
        %465 = vmatpush1.msra.mxu0 0.0
        %466 = vmatprep.subr.mxu0 0.0
        %467 = vmatpush1.msra.mxu0 0.0
        %468 = vmatprep.subr.mxu0 0.0
        %469 = vmatpush1.msra.mxu0 0.0
        %470 = vmatprep.subr.mxu0 0.0
        %471 = vmatpush1.msra.mxu0 0.0
        %472 = vmatprep.subr.mxu0 0.0
        %473 = vmatpush1.msra.mxu0 0.0
        %474 = vmatprep.subr.mxu0 0.0
        %475 = vmatpush1.msra.mxu0 0.0
        %476 = vmatprep.subr.mxu0 0.0
        %477 = vmatpush1.msra.mxu0 0.0
        %478 = vmatprep.subr.mxu0 0.0
        %479 = vmatpush1.msra.mxu0 0.0
        %480 = vmatprep.subr.mxu0 0.0
        %481 = vmatpush1.msra.mxu0 0.0
        %482 = vmatprep.subr.mxu0 0.0
        %483 = vmatpush1.msra.mxu0 0.0
        %484 = vmatprep.subr.mxu0 0.0
        %485 = vmatpush1.msra.mxu0 0.0
        %486 = vmatprep.subr.mxu0 0.0
        %487 = vmatpush1.msra.mxu0 0.0
        %488 = vmatprep.subr.mxu0 0.0
        %489 = vmatpush1.msra.mxu0 0.0
        %490 = vmatprep.subr.mxu0 0.0
        %491 = vmatpush1.msra.mxu0 0.0
        %492 = vmatprep.subr.mxu0 0.0
        %493 = vmatpush1.msra.mxu0 0.0
        %494 = vmatprep.subr.mxu0 0.0
        %495 = vmatpush1.msra.mxu0 0.0
        %496 = vmatprep.subr.mxu0 0.0
        %497 = vmatpush1.msra.mxu0 0.0
        %498 = vmatprep.subr.mxu0 0.0
        %499 = vmatpush1.msra.mxu0 0.0
        %500 = vmatprep.subr.mxu0 0.0
        %501 = vmatpush1.msra.mxu0 0.0
        %502 = vmatprep.subr.mxu0 0.0
        %503 = vmatpush1.msra.mxu0 0.0
        %504 = vmatprep.subr.mxu0 0.0
        %505 = vmatpush1.msra.mxu0 0.0
        %506 = vmatprep.subr.mxu0 0.0
        %507 = vmatpush1.msra.mxu0 0.0
        %508 = vmatprep.subr.mxu0 0.0
        %509 = vmatpush1.msra.mxu0 0.0
        %510 = vmatprep.mubr.f32.mxu0 0.0
        %511 = vmatmul.mubr.f32.gmra.mrb[0].mxu0 %v444
        %v512 = vpop.f32.mrb[0].mxu0
        %v513 = vadd.f32 %v442, %v512
        %v514 = vpop.f32.mrb[0].mxu0
        %515 = vdwg.mxu0
        %vm516 = vcmask 1048064
        %v517 = vsel %vm516, %v275, 0.0
        %v518 = vrot.slane %v517, 4
        %v519 = vadd.f32 %v517, %v518
        %v520 = vrot.slane %v519, 2
        %v521 = vadd.f32 %v519, %v520
        %v522 = vrot.slane %v521, 1
        %v523 = vadd.f32 %v521, %v522
        %525 = vrot.lane.b32.xlu0 %v523, 64
        %v526 = vpop.permute.xlu0 %525
        %v528 = vmul.f32 %v266, %v526
        %v529 = vsel %vm261, %v528, 0.0
        %530 = vadd.xlane.f32.xlu0 %v529
        %v531 = vpop.xlane.xlu0 %530
        %v532 = vadd.f32 %v531, 8.0
        %v533 = vrcp.pop %v532
        %v534 = vmul.f32 %v513, %v533
        %535 = vst.msk [vmem:[%s173] sm:$0xff] %vm261, %v534
        %s536 = sand.u32 %s75, 1
        %s537 = scalar_lea.sflag [#allocation4], %s536
        %s538 = sand.u32 %s75, 1
        %s539 = smul.addr %s538, 8
        %s540 = scalar_lea.vmem [#allocation7], %s539
        // Predicated region
        $region37: #{tpu_custom_call.1} parent=27 // pred_check
          %p541 = pneg %p85
        $region38: #{tpu_custom_call.1} parent=27 // pred_check_branch
          %543 = sbr.rel (%p541) target = $region40
        $region39: #{tpu_custom_call.1} parent=27 // pred_region
          %s545 = ssub.s32 128, 128
          %546 = vsyncadd %s537, %s545
          %s547 = smul.addr %s20, 128
          %s548 = scalar_lea.hbm %s2, %s547
          %s550 = sshll.u32 %s540, 4
          %s551 = int_to_ptr.vmem [resolvable:$true] %s550
          %553 = dma.vmem_to_hbm [thread:$0]  %s551, 128, %s548, %s537
        $region40: #{tpu_custom_call.1} parent=27 // pred_fallthru
          _
      $region28: #{tpu_custom_call.1} parent=5 // pred_fallthru
        _
      %p554 = scmp.le.s32.totalorder 2, %s15
      // Predicated region
      $region41: #{tpu_custom_call.1} parent=5 // pred_check
        %p555 = pneg %p554
      $region42: #{tpu_custom_call.1} parent=5 // pred_check_branch
        %557 = sbr.rel (%p555) target = $region44
      $region43: #{tpu_custom_call.1} parent=5 // pred_region
        %s558 = ssub.s32 %s15, 2
        // Predicated region
        $region45: #{tpu_custom_call.1} parent=43 // pred_check
          %p559 = pneg %p91
        $region46: #{tpu_custom_call.1} parent=43 // pred_check_branch
          %561 = sbr.rel (%p559) target = $region48
        $region47: #{tpu_custom_call.1} parent=43 // pred_region
          %s562 = sand.u32 %s76, 1
          %s563 = scalar_lea.sflag [#allocation4], %s562
          %s564 = sand.u32 %s76, 1
          %s565 = smul.addr %s564, 8
          %s566 = scalar_lea.vmem [#allocation7], %s565
          %567 = dma.done %s563, 128
        $region48: #{tpu_custom_call.1} parent=43 // pred_fallthru
          _
      $region44: #{tpu_custom_call.1} parent=5 // pred_fallthru
        _
    $region6: #{tpu_custom_call.1} parent=1 // loop_footer
      %s19 = sadd.s32 1, %s15
    $region7: #{tpu_custom_call.1} parent=1 // loop_footer_branch
      %14 = sbr.rel target = $region3
    $region8: #{tpu_custom_call.1} parent=1 // loop_exit
      _
    %568 = vsyncpa [#allocation3], 1
    %s569 = scalar_lea.sflag [#allocation3], 1
    %570 = vsyncpa %s569, 1
    %571 = vsyncpa [#allocation6], 1
    %572 = vsyncpa [#allocation4], 1
    %s573 = scalar_lea.sflag [#allocation4], 1
    %574 = vsyncpa %s573, 1

</llo_original>
